<compile_context>
chip_gen: v6e
topology: v6e:2x2x1
jax: 0.10.0
libtpu: 0.0.40
codegen_flags: <defaults>
</compile_context>

<pallas_src>
import functools

import jax
import jax.numpy as jnp
from jax.experimental import pallas as pl
from jax.experimental.pallas import tpu as pltpu


def _round_up(n, m):
    return (n + m - 1) // m * m


def _pick_tm(n1):
    """Row tile for x1: multiple of 8; multiple of 128 whenever grid[0] > 1.

    Prefers >= 2 i-blocks for larger N1 so the 'parallel' grid axis can shard
    across v7x's two TensorCores."""
    n1a = _round_up(n1, 8)
    if n1a <= 256:
        return n1a                                   # single i-block (block == full dim)
    return min(512, _round_up((n1a + 1) // 2, 128))


def _pick_tn(n2):
    """Column tile for x2 (lane axis): multiple of 128, capped at 512."""
    return min(512, _round_up(n2, 128))


def _cluster_loss_kernel(x1_ref, y1_ref, w1_ref,
                         x2_ref, y2_ref, w2_ref,
                         out_ref, acc_ref, *, delta):
    j = pl.program_id(1)

    @pl.when(j == 0)
    def _():
        acc_ref[...] = jnp.zeros_like(acc_ref)

    # Squared distances entirely on the MXU: augmented operands give
    # ||a||^2 + ||b||^2 - 2 a.b in a single contraction over (d + 2).
    sqd = jax.lax.dot_general(
        x1_ref[...], x2_ref[...], (((1,), (1,)), ((), ())),
        preferred_element_type=jnp.float32)                      # (TM, TN)
    sqd = jnp.maximum(sqd, 0.0)
    dist = jnp.sqrt(sqd)                                         # EUP slot
    neg = jnp.maximum(delta - dist, 0.0)
    pair_loss = jnp.where(y1_ref[...] == y2_ref[...], sqd, neg * neg)

    # Fold w1 and the row reduction into one MXU op: (1,TM) @ (TM,TN) -> (1,TN).
    row = jax.lax.dot_general(
        w1_ref[...], pair_loss, (((1,), (0,)), ((), ())),
        preferred_element_type=jnp.float32)                      # (1, TN)
    acc_ref[...] += row * w2_ref[...]

    @pl.when(j == pl.num_programs(1) - 1)
    def _():
        # Lane-dense (8, TN) writeback; only sublane 0 carries the partial sum.
        sub = jax.lax.broadcasted_iota(jnp.int32, out_ref.shape, 0)
        rows = jnp.broadcast_to(acc_ref[...], out_ref.shape)
        out_ref[...] = jnp.where(sub == 0, rows, 0.0)


def _weight_vector(y, weighted):
    """generate_weight_mask for a 1-D label vector (to_ignore=None), O(N log N)."""
    y = y.astype(jnp.int32)
    n = y.shape[0]
    if not weighted:
        return jnp.ones((n,), jnp.float32)
    sorted_y = jnp.sort(y)
    first = jnp.searchsorted(sorted_y, y)            # first sorted index of y[i]'s label
    counts_at_first = jnp.zeros((n,), jnp.float32).at[first].add(1.0)
    return 1.0 / counts_at_first[first]


@functools.partial(jax.jit, static_argnames=("delta", "weighted"))
def cluster_loss_weighted(x1, y1, x2, y2, *, delta, weighted=False):
    """Pallas implementation of ClusterLossWeighted.forward."""
    assert x1.ndim == 2 and x2.ndim == 2 and x1.shape[1] == x2.shape[1]
    n1, d = x1.shape
    n2 = x2.shape[0]

    tm = _pick_tm(n1)
    tn = _pick_tn(n2)
    n1p = _round_up(n1, tm)
    n2p = _round_up(n2, tn)

    x1p = jnp.pad(x1.astype(jnp.float32), ((0, n1p - n1), (0, 0)))
    x2p = jnp.pad(x2.astype(jnp.float32), ((0, n2p - n2), (0, 0)))

    # Augmented operands so a single MXU contraction yields squared distances.
    x1sq = jnp.sum(x1p * x1p, axis=1, keepdims=True)             # (n1p, 1)
    x2sq = jnp.sum(x2p * x2p, axis=1, keepdims=True)             # (n2p, 1)
    ones1 = jnp.ones((n1p, 1), jnp.float32)
    ones2 = jnp.ones((n2p, 1), jnp.float32)
    x1aug = jnp.concatenate([x1sq, ones1, -2.0 * x1p], axis=1)   # (n1p, d+2)
    x2aug = jnp.concatenate([ones2, x2sq, x2p], axis=1)          # (n2p, d+2)

    # Labels: padded entries get distinct sentinels (weight 0 kills them anyway).
    y1c = jnp.pad(y1.astype(jnp.int32), (0, n1p - n1),
                  constant_values=-1).reshape(n1p, 1)
    y2r = jnp.pad(y2.astype(jnp.int32), (0, n2p - n2),
                  constant_values=-2).reshape(1, n2p)

    # Weights as lane-dense rows (w1 is the lhs of the in-kernel MXU reduction).
    w1r = jnp.pad(_weight_vector(y1, weighted), (0, n1p - n1)).reshape(1, n1p)
    w2r = jnp.pad(_weight_vector(y2, weighted), (0, n2p - n2)).reshape(1, n2p)

    grid = (n1p // tm, n2p // tn)

    partials = pl.pallas_call(
        functools.partial(_cluster_loss_kernel, delta=float(delta)),
        out_shape=jax.ShapeDtypeStruct((grid[0] * 8, tn), jnp.float32),
        grid_spec=pltpu.PrefetchScalarGridSpec(
            num_scalar_prefetch=0,
            grid=grid,
            in_specs=[
                pl.BlockSpec((tm, d + 2), lambda i, j: (i, 0)),   # x1 augmented
                pl.BlockSpec((tm, 1), lambda i, j: (i, 0)),       # y1 column
                pl.BlockSpec((1, tm), lambda i, j: (0, i)),       # w1 row
                pl.BlockSpec((tn, d + 2), lambda i, j: (j, 0)),   # x2 augmented
                pl.BlockSpec((1, tn), lambda i, j: (0, j)),       # y2 row
                pl.BlockSpec((1, tn), lambda i, j: (0, j)),       # w2 row
            ],
            out_specs=pl.BlockSpec((8, tn), lambda i, j: (i, 0)),
            scratch_shapes=[pltpu.VMEM((1, tn), jnp.float32)],
        ),
        compiler_params=pltpu.CompilerParams(
            dimension_semantics=("parallel", "arbitrary")),
    )(x1aug, y1c, w1r, x2aug, y2r, w2r)

    return jnp.sum(partials)


class ClusterLossWeighted:
    """Drop-in analogue of the PyTorch module (forward pass only)."""

    def __init__(self, delta, weighted=False):
        self.delta = float(delta)
        self.weighted = weighted

    def __call__(self, x1, y1, x2, y2):
        return cluster_loss_weighted(x1, y1, x2, y2,
                                     delta=self.delta, weighted=self.weighted)


def _reference(x1, y1, x2, y2, delta, weighted):
    """Pure-JAX reference mirroring the PyTorch math (direct diff-norm, O(N^2) weights)."""
    def w(y):
        if weighted:
            c = jnp.sum((y[:, None] == y[None, :]).astype(jnp.float32), axis=1)
            return 1.0 / c
        return jnp.ones(y.shape, jnp.float32)

    wm = jnp.outer(w(y1), w(y2))
    ind = (y1[:, None] == y2[None, :]).astype(jnp.float32)
    diff = x1[:, None, :].astype(jnp.float32) - x2[None, :, :].astype(jnp.float32)
    dist = jnp.sqrt(jnp.sum(diff * diff, axis=2))
    pos = ind * dist * dist
    neg = (1.0 - ind) * jnp.square(jnp.maximum(delta - dist, 0.0))
    return jnp.sum(wm * (pos + neg))


if __name__ == "__main__":
    key = jax.random.PRNGKey(0)
    k1, k2, k3, k4 = jax.random.split(key, 4)
    N1, N2, D = 64, 80, 32
    delta = 2.0

    x1 = jax.random.normal(k1, (N1, D), dtype=jnp.float32)
    x2 = jax.random.normal(k2, (N2, D), dtype=jnp.float32)
    y1 = jax.random.randint(k3, (N1,), 0, 5)
    y2 = jax.random.randint(k4, (N2,), 0, 5)

    # weighted=False path
    loss = jax.block_until_ready(ClusterLossWeighted(delta)(x1, y1, x2, y2))
    ref = _reference(x1, y1, x2, y2, delta, weighted=False)
    assert jnp.allclose(loss, ref, rtol=1e-4, atol=1e-2), (loss, ref)

    # weighted=True path
    loss_w = jax.block_until_ready(
        ClusterLossWeighted(delta, weighted=True)(x1, y1, x2, y2))
    ref_w = _reference(x1, y1, x2, y2, delta, weighted=True)
    assert jnp.allclose(loss_w, ref_w, rtol=1e-4, atol=1e-2), (loss_w, ref_w)

    print("KERNEL_OK")
</pallas_src>

<mosaic_0001>
module attributes {stable_mosaic.version = 11 : i64} {
  func.func @_cluster_loss_kernel(%arg0: i32, %arg1: i32, %arg2: memref<64x34xf32, #tpu.memory_space<vmem>>, %arg3: memref<64x1xi32, #tpu.memory_space<vmem>>, %arg4: memref<1x64xf32, #tpu.memory_space<vmem>>, %arg5: memref<128x34xf32, #tpu.memory_space<vmem>>, %arg6: memref<1x128xi32, #tpu.memory_space<vmem>>, %arg7: memref<1x128xf32, #tpu.memory_space<vmem>>, %arg8: memref<8x128xf32, #tpu.memory_space<vmem>>, %arg9: memref<1x128xf32, #tpu.memory_space<vmem>>) attributes {dimension_semantics = [#tpu.dimension_semantics<parallel>, #tpu.dimension_semantics<arbitrary>], iteration_bounds = array<i64: 1, 1>, scalar_prefetch = 0 : i64, scratch_operands = 1 : i64, tpu.core_type = #tpu.core_type<tc>, window_params = [{transform_indices = @transform_0, window_bounds = array<i64: 64, 34>}, {transform_indices = @transform_1, window_bounds = array<i64: 64, 1>}, {transform_indices = @transform_2, window_bounds = array<i64: 1, 64>}, {transform_indices = @transform_3, window_bounds = array<i64: 128, 34>}, {transform_indices = @transform_4, window_bounds = array<i64: 1, 128>}, {transform_indices = @transform_5, window_bounds = array<i64: 1, 128>}, {transform_indices = @transform_6, window_bounds = array<i64: 8, 128>}]} {
    %c0_i32 = arith.constant 0 : i32
    %0 = arith.cmpi eq, %arg1, %c0_i32 : i32
    %1 = arith.extui %0 : i1 to i32
    %c0_i32_0 = arith.constant 0 : i32
    %2 = arith.cmpi ne, %1, %c0_i32_0 : i32
    scf.if %2 {
      %cst_22 = arith.constant 0.000000e+00 : f32
      %30 = vector.broadcast %cst_22 : f32 to vector<1x128xf32>
      %c0_23 = arith.constant 0 : index
      %c0_24 = arith.constant 0 : index
      %31 = vector.load %arg9[%c0_23, %c0_24] : memref<1x128xf32, #tpu.memory_space<vmem>>, vector<1x128xf32>
      tpu.vector_store %arg9[%c0_23, %c0_24], %30 {strides = array<i32>} : memref<1x128xf32, #tpu.memory_space<vmem>>, vector<1x128xf32>,
    } else {
    }
    %c0 = arith.constant 0 : index
    %c0_1 = arith.constant 0 : index
    %3 = vector.load %arg2[%c0, %c0_1] : memref<64x34xf32, #tpu.memory_space<vmem>>, vector<64x34xf32>
    %c0_2 = arith.constant 0 : index
    %c0_3 = arith.constant 0 : index
    %4 = vector.load %arg5[%c0_2, %c0_3] : memref<128x34xf32, #tpu.memory_space<vmem>>, vector<128x34xf32>
    %cst = arith.constant dense<0.000000e+00> : vector<64x128xf32>
    %5 = tpu.matmul %3, %4, %cst {dimension_numbers = #tpu.dot_dimension_numbers<[1], [1], [0], [0], [0, 0, 1, 0], [], []>} : vector<64x34xf32>, vector<128x34xf32>, vector<64x128xf32> -> vector<64x128xf32>
    %cst_4 = arith.constant 0.000000e+00 : f32
    %6 = vector.broadcast %cst_4 : f32 to vector<64x128xf32>
    %7 = arith.maximumf %5, %6 : vector<64x128xf32>
    %8 = math.sqrt %7 : vector<64x128xf32>
    %cst_5 = arith.constant 2.000000e+00 : f32
    %9 = vector.broadcast %cst_5 : f32 to vector<64x128xf32>
    %10 = arith.subf %9, %8 : vector<64x128xf32>
    %cst_6 = arith.constant 0.000000e+00 : f32
    %11 = vector.broadcast %cst_6 : f32 to vector<64x128xf32>
    %12 = arith.maximumf %10, %11 : vector<64x128xf32>
    %c0_7 = arith.constant 0 : index
    %c0_8 = arith.constant 0 : index
    %13 = vector.load %arg3[%c0_7, %c0_8] : memref<64x1xi32, #tpu.memory_space<vmem>>, vector<64x1xi32>
    %c0_9 = arith.constant 0 : index
    %c0_10 = arith.constant 0 : index
    %14 = vector.load %arg6[%c0_9, %c0_10] : memref<1x128xi32, #tpu.memory_space<vmem>>, vector<1x128xi32>
    %15 = vector.broadcast %13 : vector<64x1xi32> to vector<64x128xi32>
    %16 = vector.broadcast %14 : vector<1x128xi32> to vector<64x128xi32>
    %17 = arith.cmpi eq, %15, %16 : vector<64x128xi32>
    %18 = arith.mulf %12, %12 : vector<64x128xf32>
    %19 = arith.select %17, %7, %18 : vector<64x128xi1>, vector<64x128xf32>
    %c0_11 = arith.constant 0 : index
    %c0_12 = arith.constant 0 : index
    %20 = vector.load %arg4[%c0_11, %c0_12] : memref<1x64xf32, #tpu.memory_space<vmem>>, vector<1x64xf32>
    %cst_13 = arith.constant dense<0.000000e+00> : vector<1x128xf32>
    %21 = tpu.matmul %20, %19, %cst_13 {dimension_numbers = #tpu.dot_dimension_numbers<[1], [0], [0], [1], [0, 0, 1, 1], [], []>} : vector<1x64xf32>, vector<64x128xf32>, vector<1x128xf32> -> vector<1x128xf32>
    %c0_14 = arith.constant 0 : index
    %c0_15 = arith.constant 0 : index
    %22 = vector.load %arg9[%c0_14, %c0_15] : memref<1x128xf32, #tpu.memory_space<vmem>>, vector<1x128xf32>
    %c0_16 = arith.constant 0 : index
    %c0_17 = arith.constant 0 : index
    %23 = vector.load %arg7[%c0_16, %c0_17] : memref<1x128xf32, #tpu.memory_space<vmem>>, vector<1x128xf32>
    %24 = arith.mulf %21, %23 : vector<1x128xf32>
    %25 = arith.addf %22, %24 : vector<1x128xf32>
    %c0_18 = arith.constant 0 : index
    %c0_19 = arith.constant 0 : index
    %26 = vector.load %arg9[%c0_18, %c0_19] : memref<1x128xf32, #tpu.memory_space<vmem>>, vector<1x128xf32>
    tpu.vector_store %arg9[%c0_18, %c0_19], %25 {strides = array<i32>} : memref<1x128xf32, #tpu.memory_space<vmem>>, vector<1x128xf32>,
    %c0_i32_20 = arith.constant 0 : i32
    %27 = arith.cmpi eq, %arg1, %c0_i32_20 : i32
    %28 = arith.extui %27 : i1 to i32
    %c0_i32_21 = arith.constant 0 : i32
    %29 = arith.cmpi ne, %28, %c0_i32_21 : i32
    scf.if %29 {
      %30 = tpu.iota {dimensions = array<i32: 0>} : vector<8x128xi32>
      %c0_22 = arith.constant 0 : index
      %c0_23 = arith.constant 0 : index
      %31 = vector.load %arg9[%c0_22, %c0_23] : memref<1x128xf32, #tpu.memory_space<vmem>>, vector<1x128xf32>
      %32 = vector.shape_cast %31 : vector<1x128xf32> to vector<1x128xf32>
      %33 = vector.broadcast %32 : vector<1x128xf32> to vector<8x128xf32>
      %c0_i32_24 = arith.constant 0 : i32
      %34 = vector.broadcast %c0_i32_24 : i32 to vector<8x128xi32>
      %35 = arith.cmpi eq, %30, %34 : vector<8x128xi32>
      %cst_25 = arith.constant 0.000000e+00 : f32
      %36 = vector.broadcast %cst_25 : f32 to vector<8x128xf32>
      %37 = arith.select %35, %33, %36 : vector<8x128xi1>, vector<8x128xf32>
      %c0_26 = arith.constant 0 : index
      %c0_27 = arith.constant 0 : index
      %38 = vector.load %arg8[%c0_26, %c0_27] : memref<8x128xf32, #tpu.memory_space<vmem>>, vector<8x128xf32>
      tpu.vector_store %arg8[%c0_26, %c0_27], %37 {strides = array<i32>} : memref<8x128xf32, #tpu.memory_space<vmem>>, vector<8x128xf32>,
    } else {
    }
    return
  }
  func.func @transform_0(%arg0: i32, %arg1: i32) -> (i32, i32) {
    %c0_i32 = arith.constant 0 : i32
    %c0_i32_0 = arith.constant 0 : i32
    return %arg0, %c0_i32 : i32, i32
  }
  func.func @transform_1(%arg0: i32, %arg1: i32) -> (i32, i32) {
    %c0_i32 = arith.constant 0 : i32
    %c0_i32_0 = arith.constant 0 : i32
    return %arg0, %c0_i32 : i32, i32
  }
  func.func @transform_2(%arg0: i32, %arg1: i32) -> (i32, i32) {
    %c0_i32 = arith.constant 0 : i32
    %c0_i32_0 = arith.constant 0 : i32
    return %c0_i32, %arg0 : i32, i32
  }
  func.func @transform_3(%arg0: i32, %arg1: i32) -> (i32, i32) {
    %c0_i32 = arith.constant 0 : i32
    %c0_i32_0 = arith.constant 0 : i32
    return %arg1, %c0_i32 : i32, i32
  }
  func.func @transform_4(%arg0: i32, %arg1: i32) -> (i32, i32) {
    %c0_i32 = arith.constant 0 : i32
    %c0_i32_0 = arith.constant 0 : i32
    return %c0_i32, %arg1 : i32, i32
  }
  func.func @transform_5(%arg0: i32, %arg1: i32) -> (i32, i32) {
    %c0_i32 = arith.constant 0 : i32
    %c0_i32_0 = arith.constant 0 : i32
    return %c0_i32, %arg1 : i32, i32
  }
  func.func @transform_6(%arg0: i32, %arg1: i32) -> (i32, i32) {
    %c0_i32 = arith.constant 0 : i32
    %c0_i32_0 = arith.constant 0 : i32
    return %arg0, %c0_i32 : i32, i32
  }
}

</mosaic_0001>

<llo_original>
// kernel: cluster_loss_weighted.1
$region0: #{cluster_loss_weighted.1}
  #allocation0 [shape = 'u32[]', space=smem, size = 0x4, offset = 0x4, fixed_abs, tag = 'smem constant byte address 0x4 - core index']
  #allocation1 [shape = 'u32[144,128]{1,0:T(1,128)}', space=vmem, size = 0x12000, scoped, tag = 'internal scratch']
  #allocation2 [shape = 'f32[1,128]{1,0:T(1,128)}', space=vmem, size = 0x200, scoped, tag = 'scratch operand']
  %s0 = inlined_call_operand.vmem [shape: f32[64,34], index: 0, kind: input, shape index: {}]
  %s1 = inlined_call_operand.vmem [shape: s32[64,1], index: 1, kind: input, shape index: {}]
  %s2 = inlined_call_operand.vmem [shape: f32[1,64], index: 2, kind: input, shape index: {}]
  %s3 = inlined_call_operand.vmem [shape: f32[128,34], index: 3, kind: input, shape index: {}]
  %s4 = inlined_call_operand.vmem [shape: s32[1,128], index: 4, kind: input, shape index: {}]
  %s5 = inlined_call_operand.vmem [shape: f32[1,128], index: 5, kind: input, shape index: {}]
  %s6 = inlined_call_operand.vmem [shape: f32[8,128], index: 6, kind: output, shape index: {}]
  %s7 = sld [smem:[#allocation0]]
  $region42: #{cluster_loss_weighted.1} parent=0
    _
  %s9 = ssub.s32 1, %s7
  %s10 = scalar_select 0, %s9, %s7
  // Predicated region
  $region2: #{cluster_loss_weighted.1} parent=0 // pred_check
    _
  $region3: #{cluster_loss_weighted.1} parent=0 // pred_check_branch
    %12 = sbr.rel (0) target = $region5
  $region4: #{cluster_loss_weighted.1} parent=0 // pred_region
    _
  $region5: #{cluster_loss_weighted.1} parent=0 // pred_fallthru
    _
  // Predicated region
  $region6: #{cluster_loss_weighted.1} parent=0 // pred_check
    _
  $region7: #{cluster_loss_weighted.1} parent=0 // pred_check_branch
    %14 = sbr.rel (0) target = $region9
  $region8: #{cluster_loss_weighted.1} parent=0 // pred_region
    _
  $region9: #{cluster_loss_weighted.1} parent=0 // pred_fallthru
    _
  // Predicated region
  $region10: #{cluster_loss_weighted.1} parent=0 // pred_check
    _
  $region11: #{cluster_loss_weighted.1} parent=0 // pred_check_branch
    %16 = sbr.rel (0) target = $region13
  $region12: #{cluster_loss_weighted.1} parent=0 // pred_region
    _
  $region13: #{cluster_loss_weighted.1} parent=0 // pred_fallthru
    _
  // Predicated region
  $region14: #{cluster_loss_weighted.1} parent=0 // pred_check
    _
  $region15: #{cluster_loss_weighted.1} parent=0 // pred_check_branch
    %18 = sbr.rel (0) target = $region17
  $region16: #{cluster_loss_weighted.1} parent=0 // pred_region
    _
  $region17: #{cluster_loss_weighted.1} parent=0 // pred_fallthru
    _
  // Predicated region
  $region18: #{cluster_loss_weighted.1} parent=0 // pred_check
    _
  $region19: #{cluster_loss_weighted.1} parent=0 // pred_check_branch
    %20 = sbr.rel (0) target = $region21
  $region20: #{cluster_loss_weighted.1} parent=0 // pred_region
    _
  $region21: #{cluster_loss_weighted.1} parent=0 // pred_fallthru
    _
  // Predicated region
  $region22: #{cluster_loss_weighted.1} parent=0 // pred_check
    _
  $region23: #{cluster_loss_weighted.1} parent=0 // pred_check_branch
    %22 = sbr.rel (0) target = $region25
  $region24: #{cluster_loss_weighted.1} parent=0 // pred_region
    _
  $region25: #{cluster_loss_weighted.1} parent=0 // pred_fallthru
    _
  %p23 = scmp.eq.s32.totalorder 0, 0
  // Predicated region
  $region26: #{cluster_loss_weighted.1} parent=0 // pred_check
    %p24 = pneg %p23
  $region27: #{cluster_loss_weighted.1} parent=0 // pred_check_branch
    %26 = sbr.rel (%p24) target = $region29
  $region28: #{cluster_loss_weighted.1} parent=0 // pred_region
    %27 = vst [vmem:[#allocation2] sm:$0x1] 0.0
  $region29: #{cluster_loss_weighted.1} parent=0 // pred_fallthru
    _
  %v28 = vld [vmem:[%s0] sm:$0xff]
  %v29 = vld [vmem:[%s0 + $0x8] sm:$0xff]
  %v30 = vld [vmem:[%s0 + $0x10] sm:$0xff]
  %v31 = vld [vmem:[%s0 + $0x18] sm:$0xff]
  %v32 = vld [vmem:[%s0 + $0x20] sm:$0xff]
  %v33 = vld [vmem:[%s0 + $0x28] sm:$0xff]
  %v34 = vld [vmem:[%s0 + $0x30] sm:$0xff]
  %v35 = vld [vmem:[%s0 + $0x38] sm:$0xff]
  %v36 = vld [vmem:[%s3] sm:$0xff]
  %v37 = vld [vmem:[%s3 + $0x8] sm:$0xff]
  %v38 = vld [vmem:[%s3 + $0x10] sm:$0xff]
  %v39 = vld [vmem:[%s3 + $0x18] sm:$0xff]
  %v40 = vld [vmem:[%s3 + $0x20] sm:$0xff]
  %v41 = vld [vmem:[%s3 + $0x28] sm:$0xff]
  %v42 = vld [vmem:[%s3 + $0x30] sm:$0xff]
  %v43 = vld [vmem:[%s3 + $0x38] sm:$0xff]
  %v44 = vld [vmem:[%s3 + $0x40] sm:$0xff]
  %v45 = vld [vmem:[%s3 + $0x48] sm:$0xff]
  %v46 = vld [vmem:[%s3 + $0x50] sm:$0xff]
  %v47 = vld [vmem:[%s3 + $0x58] sm:$0xff]
  %v48 = vld [vmem:[%s3 + $0x60] sm:$0xff]
  %v49 = vld [vmem:[%s3 + $0x68] sm:$0xff]
  %v50 = vld [vmem:[%s3 + $0x70] sm:$0xff]
  %v51 = vld [vmem:[%s3 + $0x78] sm:$0xff]
  %vm52 = vcmask 277504
  %v54 = vsel %vm52, %v28, 0
  %v57 = vsel %vm52, %v29, 0
  %v60 = vsel %vm52, %v30, 0
  %v63 = vsel %vm52, %v31, 0
  %v66 = vsel %vm52, %v32, 0
  %v69 = vsel %vm52, %v33, 0
  %v72 = vsel %vm52, %v34, 0
  %v75 = vsel %vm52, %v35, 0
  %v78 = vsel %vm52, %v36, 0
  %v81 = vsel %vm52, %v37, 0
  %v84 = vsel %vm52, %v38, 0
  %v87 = vsel %vm52, %v39, 0
  %v90 = vsel %vm52, %v40, 0
  %v93 = vsel %vm52, %v41, 0
  %v96 = vsel %vm52, %v42, 0
  %v99 = vsel %vm52, %v43, 0
  %v102 = vsel %vm52, %v44, 0
  %v105 = vsel %vm52, %v45, 0
  %v108 = vsel %vm52, %v46, 0
  %v111 = vsel %vm52, %v47, 0
  %v114 = vsel %vm52, %v48, 0
  %v117 = vsel %vm52, %v49, 0
  %v120 = vsel %vm52, %v50, 0
  %v123 = vsel %vm52, %v51, 0
  %125 = vmatprep.subr.mxu0 0.0
  %126 = vmatpush1.xpose.msra.mxu0 %v123
  %127 = vmatprep.subr.mxu0 0.0
  %128 = vmatpush1.xpose.msra.mxu0 %v120
  %129 = vmatprep.subr.mxu0 0.0
  %130 = vmatpush1.xpose.msra.mxu0 %v117
  %131 = vmatprep.subr.mxu0 0.0
  %132 = vmatpush1.xpose.msra.mxu0 %v114
  %133 = vmatprep.subr.mxu0 0.0
  %134 = vmatpush1.xpose.msra.mxu0 %v111
  %135 = vmatprep.subr.mxu0 0.0
  %136 = vmatpush1.xpose.msra.mxu0 %v108
  %137 = vmatprep.subr.mxu0 0.0
  %138 = vmatpush1.xpose.msra.mxu0 %v105
  %139 = vmatprep.subr.mxu0 0.0
  %140 = vmatpush1.xpose.msra.mxu0 %v102
  %141 = vmatprep.subr.mxu0 0.0
  %142 = vmatpush1.xpose.msra.mxu0 %v99
  %143 = vmatprep.subr.mxu0 0.0
  %144 = vmatpush1.xpose.msra.mxu0 %v96
  %145 = vmatprep.subr.mxu0 0.0
  %146 = vmatpush1.xpose.msra.mxu0 %v93
  %147 = vmatprep.subr.mxu0 0.0
  %148 = vmatpush1.xpose.msra.mxu0 %v90
  %149 = vmatprep.subr.mxu0 0.0
  %150 = vmatpush1.xpose.msra.mxu0 %v87
  %151 = vmatprep.subr.mxu0 0.0
  %152 = vmatpush1.xpose.msra.mxu0 %v84
  %153 = vmatprep.subr.mxu0 0.0
  %154 = vmatpush1.xpose.msra.mxu0 %v81
  %155 = vmatprep.subr.mxu0 0.0
  %156 = vmatpush1.xpose.msra.mxu0 %v78
  %157 = vmatprep.subr.mxu0 0.0
  %158 = vmatpush2.xpose.msra.mxu0 0.0
  %159 = vmatprep.subr.mxu0 0.0
  %160 = vmatpush2.xpose.msra.mxu0 0.0
  %161 = vmatprep.subr.mxu0 0.0
  %162 = vmatpush2.xpose.msra.mxu0 0.0
  %163 = vmatprep.subr.mxu0 0.0
  %164 = vmatpush2.xpose.msra.mxu0 0.0
  %165 = vmatprep.subr.mxu0 0.0
  %166 = vmatpush2.xpose.msra.mxu0 0.0
  %167 = vmatprep.subr.mxu0 0.0
  %168 = vmatpush2.xpose.msra.mxu0 0.0
  %169 = vmatprep.subr.mxu0 0.0
  %170 = vmatpush2.xpose.msra.mxu0 0.0
  %171 = vmatprep.subr.mxu0 0.0
  %172 = vmatpush2.xpose.msra.mxu0 0.0
  %173 = vmatprep.subr.mxu0 0.0
  %174 = vmatpush2.xpose.msra.mxu0 0.0
  %175 = vmatprep.subr.mxu0 0.0
  %176 = vmatpush2.xpose.msra.mxu0 0.0
  %177 = vmatprep.subr.mxu0 0.0
  %178 = vmatpush2.xpose.msra.mxu0 0.0
  %179 = vmatprep.subr.mxu0 0.0
  %180 = vmatpush2.xpose.msra.mxu0 0.0
  %181 = vmatprep.subr.mxu0 0.0
  %182 = vmatpush2.xpose.msra.mxu0 0.0
  %183 = vmatprep.subr.mxu0 0.0
  %184 = vmatpush2.xpose.msra.mxu0 0.0
  %185 = vmatprep.subr.mxu0 0.0
  %186 = vmatpush2.xpose.msra.mxu0 0.0
  %187 = vmatprep.subr.mxu0 0.0
  %188 = vmatpush2.xpose.msra.mxu0 0.0
  %189 = vmatprep.mubr.f32.mxu0 0.0
  %190 = vmatmul.mubr.f32.gmra.mxu0 %v54
  %v191 = vpop.f32.mrf.mxu0
  %v192 = vadd.f32 0.0, %v191
  %v193 = vpop.f32.mrf.mxu0
  %194 = vmatprep.mubr.f32.mxu0 0.0
  %195 = vmatmul.mubr.f32.gmra.mxu0 %v57
  %v196 = vpop.f32.mrf.mxu0
  %v197 = vadd.f32 0.0, %v196
  %v198 = vpop.f32.mrf.mxu0
  %199 = vmatprep.mubr.f32.mxu0 0.0
  %200 = vmatmul.mubr.f32.gmra.mxu0 %v60
  %v201 = vpop.f32.mrf.mxu0
  %v202 = vadd.f32 0.0, %v201
  %v203 = vpop.f32.mrf.mxu0
  %204 = vmatprep.mubr.f32.mxu0 0.0
  %205 = vmatmul.mubr.f32.gmra.mxu0 %v63
  %v206 = vpop.f32.mrf.mxu0
  %v207 = vadd.f32 0.0, %v206
  %v208 = vpop.f32.mrf.mxu0
  %209 = vmatprep.mubr.f32.mxu0 0.0
  %210 = vmatmul.mubr.f32.gmra.mxu0 %v66
  %v211 = vpop.f32.mrf.mxu0
  %v212 = vadd.f32 0.0, %v211
  %v213 = vpop.f32.mrf.mxu0
  %214 = vmatprep.mubr.f32.mxu0 0.0
  %215 = vmatmul.mubr.f32.gmra.mxu0 %v69
  %v216 = vpop.f32.mrf.mxu0
  %v217 = vadd.f32 0.0, %v216
  %v218 = vpop.f32.mrf.mxu0
  %219 = vmatprep.mubr.f32.mxu0 0.0
  %220 = vmatmul.mubr.f32.gmra.mxu0 %v72
  %v221 = vpop.f32.mrf.mxu0
  %v222 = vadd.f32 0.0, %v221
  %v223 = vpop.f32.mrf.mxu0
  %224 = vmatprep.mubr.f32.mxu0 0.0
  %225 = vmatmul.mubr.f32.gmra.mxu0 %v75
  %v226 = vpop.f32.mrf.mxu0
  %v227 = vadd.f32 0.0, %v226
  %v228 = vpop.f32.mrf.mxu0
  %229 = vdwg.mxu0
  %v230 = vmax.f32 %v192, 0.0
  %v231 = vmax.f32 %v197, 0.0
  %v232 = vmax.f32 %v202, 0.0
  %v233 = vmax.f32 %v207, 0.0
  %v234 = vmax.f32 %v212, 0.0
  %v235 = vmax.f32 %v217, 0.0
  %v236 = vmax.f32 %v222, 0.0
  %v237 = vmax.f32 %v227, 0.0
  %v238 = vrsqrt.pop %v230
  %v239 = vmul.f32 %v230, %v238
  %vm240 = vcmp.eq.f32.partialorder %v230, inf
  %v241 = vsel %vm240, %v230, %v239
  %vm242 = vcmp.eq.f32.partialorder %v230, 0.0
  %v243 = vand.u32 %v230, 2147483648
  %v244 = vsel %vm242, %v243, %v241
  %v245 = vrsqrt.pop %v231
  %v246 = vmul.f32 %v231, %v245
  %vm247 = vcmp.eq.f32.partialorder %v231, inf
  %v248 = vsel %vm247, %v231, %v246
  %vm249 = vcmp.eq.f32.partialorder %v231, 0.0
  %v250 = vand.u32 %v231, 2147483648
  %v251 = vsel %vm249, %v250, %v248
  %v252 = vrsqrt.pop %v232
  %v253 = vmul.f32 %v232, %v252
  %vm254 = vcmp.eq.f32.partialorder %v232, inf
  %v255 = vsel %vm254, %v232, %v253
  %vm256 = vcmp.eq.f32.partialorder %v232, 0.0
  %v257 = vand.u32 %v232, 2147483648
  %v258 = vsel %vm256, %v257, %v255
  %v259 = vrsqrt.pop %v233
  %v260 = vmul.f32 %v233, %v259
  %vm261 = vcmp.eq.f32.partialorder %v233, inf
  %v262 = vsel %vm261, %v233, %v260
  %vm263 = vcmp.eq.f32.partialorder %v233, 0.0
  %v264 = vand.u32 %v233, 2147483648
  %v265 = vsel %vm263, %v264, %v262
  %v266 = vrsqrt.pop %v234
  %v267 = vmul.f32 %v234, %v266
  %vm268 = vcmp.eq.f32.partialorder %v234, inf
  %v269 = vsel %vm268, %v234, %v267
  %vm270 = vcmp.eq.f32.partialorder %v234, 0.0
  %v271 = vand.u32 %v234, 2147483648
  %v272 = vsel %vm270, %v271, %v269
  %v273 = vrsqrt.pop %v235
  %v274 = vmul.f32 %v235, %v273
  %vm275 = vcmp.eq.f32.partialorder %v235, inf
  %v276 = vsel %vm275, %v235, %v274
  %vm277 = vcmp.eq.f32.partialorder %v235, 0.0
  %v278 = vand.u32 %v235, 2147483648
  %v279 = vsel %vm277, %v278, %v276
  %v280 = vrsqrt.pop %v236
  %v281 = vmul.f32 %v236, %v280
  %vm282 = vcmp.eq.f32.partialorder %v236, inf
  %v283 = vsel %vm282, %v236, %v281
  %vm284 = vcmp.eq.f32.partialorder %v236, 0.0
  %v285 = vand.u32 %v236, 2147483648
  %v286 = vsel %vm284, %v285, %v283
  %v287 = vrsqrt.pop %v237
  %v288 = vmul.f32 %v237, %v287
  %vm289 = vcmp.eq.f32.partialorder %v237, inf
  %v290 = vsel %vm289, %v237, %v288
  %vm291 = vcmp.eq.f32.partialorder %v237, 0.0
  %v292 = vand.u32 %v237, 2147483648
  %v293 = vsel %vm291, %v292, %v290
  %v294 = vsub.f32 2.0, %v244
  %v295 = vsub.f32 2.0, %v251
  %v296 = vsub.f32 2.0, %v258
  %v297 = vsub.f32 2.0, %v265
  %v298 = vsub.f32 2.0, %v272
  %v299 = vsub.f32 2.0, %v279
  %v300 = vsub.f32 2.0, %v286
  %v301 = vsub.f32 2.0, %v293
  %v302 = vmax.f32 %v294, 0.0
  %v303 = vmax.f32 %v295, 0.0
  %v304 = vmax.f32 %v296, 0.0
  %v305 = vmax.f32 %v297, 0.0
  %v306 = vmax.f32 %v298, 0.0
  %v307 = vmax.f32 %v299, 0.0
  %v308 = vmax.f32 %v300, 0.0
  %v309 = vmax.f32 %v301, 0.0
  %v310 = vld [vmem:[%s1] sm:$0xff]
  %v311 = vld [vmem:[%s1 + $0x8] sm:$0xff]
  %v312 = vld [vmem:[%s1 + $0x10] sm:$0xff]
  %v313 = vld [vmem:[%s1 + $0x18] sm:$0xff]
  %v314 = vld [vmem:[%s1 + $0x20] sm:$0xff]
  %v315 = vld [vmem:[%s1 + $0x28] sm:$0xff]
  %v316 = vld [vmem:[%s1 + $0x30] sm:$0xff]
  %v317 = vld [vmem:[%s1 + $0x38] sm:$0xff]
  %v318 = vld [vmem:[%s4] sm:$0x1]
  %319 = vset.pattern.permute.xlu0 0
  %320 = vperm.xlu0 %319, %v310
  %v321 = vpop.permute.xlu0 %320
  %322 = vset.pattern.permute.xlu0 0
  %323 = vperm.xlu0 %322, %v311
  %v324 = vpop.permute.xlu0 %323
  %325 = vset.pattern.permute.xlu0 0
  %326 = vperm.xlu0 %325, %v312
  %v327 = vpop.permute.xlu0 %326
  %328 = vset.pattern.permute.xlu0 0
  %329 = vperm.xlu0 %328, %v313
  %v330 = vpop.permute.xlu0 %329
  %331 = vset.pattern.permute.xlu0 0
  %332 = vperm.xlu0 %331, %v314
  %v333 = vpop.permute.xlu0 %332
  %334 = vset.pattern.permute.xlu0 0
  %335 = vperm.xlu0 %334, %v315
  %v336 = vpop.permute.xlu0 %335
  %337 = vset.pattern.permute.xlu0 0
  %338 = vperm.xlu0 %337, %v316
  %v339 = vpop.permute.xlu0 %338
  %340 = vset.pattern.permute.xlu0 0
  %341 = vperm.xlu0 %340, %v317
  %v342 = vpop.permute.xlu0 %341
  %v343 = vlaneseq
  %v344 = vshrl.u32 %v343, 7
  %v345 = vsub.s32 0, %v344
  %v346 = vrot.slane %v318, %v345
  %vm347 = vcmp.eq.s32.totalorder %v321, %v346
  %vm348 = vcmp.eq.s32.totalorder %v324, %v346
  %vm349 = vcmp.eq.s32.totalorder %v327, %v346
  %vm350 = vcmp.eq.s32.totalorder %v330, %v346
  %vm351 = vcmp.eq.s32.totalorder %v333, %v346
  %vm352 = vcmp.eq.s32.totalorder %v336, %v346
  %vm353 = vcmp.eq.s32.totalorder %v339, %v346
  %vm354 = vcmp.eq.s32.totalorder %v342, %v346
  %v355 = vmul.f32 %v302, %v302
  %v356 = vmul.f32 %v303, %v303
  %v357 = vmul.f32 %v304, %v304
  %v358 = vmul.f32 %v305, %v305
  %v359 = vmul.f32 %v306, %v306
  %v360 = vmul.f32 %v307, %v307
  %v361 = vmul.f32 %v308, %v308
  %v362 = vmul.f32 %v309, %v309
  %v363 = vsel %vm347, %v230, %v355
  %v364 = vsel %vm348, %v231, %v356
  %v365 = vsel %vm349, %v232, %v357
  %v366 = vsel %vm350, %v233, %v358
  %v367 = vsel %vm351, %v234, %v359
  %v368 = vsel %vm352, %v235, %v360
  %v369 = vsel %vm353, %v236, %v361
  %v370 = vsel %vm354, %v237, %v362
  %v371 = vld [vmem:[%s2] sm:$0x1]
  %vm372 = vcmask 523264
  %v374 = vsel %vm372, %v371, 0
  %376 = vmatprep.subr.mxu0 0.0
  %377 = vmatpush1.msra.mxu0 0.0
  %378 = vmatprep.subr.mxu0 0.0
  %379 = vmatpush1.msra.mxu0 0.0
  %380 = vmatprep.subr.mxu0 0.0
  %381 = vmatpush1.msra.mxu0 0.0
  %382 = vmatprep.subr.mxu0 0.0
  %383 = vmatpush1.msra.mxu0 0.0
  %384 = vmatprep.subr.mxu0 0.0
  %385 = vmatpush1.msra.mxu0 0.0
  %386 = vmatprep.subr.mxu0 0.0
  %387 = vmatpush1.msra.mxu0 0.0
  %388 = vmatprep.subr.mxu0 0.0
  %389 = vmatpush1.msra.mxu0 0.0
  %390 = vmatprep.subr.mxu0 0.0
  %391 = vmatpush1.msra.mxu0 0.0
  %392 = vmatprep.subr.mxu0 0.0
  %393 = vmatpush1.msra.mxu0 %v370
  %394 = vmatprep.subr.mxu0 0.0
  %395 = vmatpush1.msra.mxu0 %v369
  %396 = vmatprep.subr.mxu0 0.0
  %397 = vmatpush1.msra.mxu0 %v368
  %398 = vmatprep.subr.mxu0 0.0
  %399 = vmatpush1.msra.mxu0 %v367
  %400 = vmatprep.subr.mxu0 0.0
  %401 = vmatpush1.msra.mxu0 %v366
  %402 = vmatprep.subr.mxu0 0.0
  %403 = vmatpush1.msra.mxu0 %v365
  %404 = vmatprep.subr.mxu0 0.0
  %405 = vmatpush1.msra.mxu0 %v364
  %406 = vmatprep.subr.mxu0 0.0
  %407 = vmatpush1.msra.mxu0 %v363
  %408 = vmatprep.subr.mxu0 0.0
  %409 = vmatpush2.msra.mxu0 0.0
  %410 = vmatprep.subr.mxu0 0.0
  %411 = vmatpush2.msra.mxu0 0.0
  %412 = vmatprep.subr.mxu0 0.0
  %413 = vmatpush2.msra.mxu0 0.0
  %414 = vmatprep.subr.mxu0 0.0
  %415 = vmatpush2.msra.mxu0 0.0
  %416 = vmatprep.subr.mxu0 0.0
  %417 = vmatpush2.msra.mxu0 0.0
  %418 = vmatprep.subr.mxu0 0.0
  %419 = vmatpush2.msra.mxu0 0.0
  %420 = vmatprep.subr.mxu0 0.0
  %421 = vmatpush2.msra.mxu0 0.0
  %422 = vmatprep.subr.mxu0 0.0
  %423 = vmatpush2.msra.mxu0 0.0
  %424 = vmatprep.subr.mxu0 0.0
  %425 = vmatpush2.msra.mxu0 0.0
  %426 = vmatprep.subr.mxu0 0.0
  %427 = vmatpush2.msra.mxu0 0.0
  %428 = vmatprep.subr.mxu0 0.0
  %429 = vmatpush2.msra.mxu0 0.0
  %430 = vmatprep.subr.mxu0 0.0
  %431 = vmatpush2.msra.mxu0 0.0
  %432 = vmatprep.subr.mxu0 0.0
  %433 = vmatpush2.msra.mxu0 0.0
  %434 = vmatprep.subr.mxu0 0.0
  %435 = vmatpush2.msra.mxu0 0.0
  %436 = vmatprep.subr.mxu0 0.0
  %437 = vmatpush2.msra.mxu0 0.0
  %438 = vmatprep.subr.mxu0 0.0
  %439 = vmatpush2.msra.mxu0 0.0
  %440 = vmatprep.mubr.f32.mxu0 0.0
  %441 = vmatmul.mubr.f32.gmra.mxu0 %v374
  %v442 = vpop.f32.mrf.mxu0
  %v443 = vadd.f32 0.0, %v442
  %v444 = vpop.f32.mrf.mxu0
  %445 = vdwg.mxu0
  %v446 = vld [vmem:[#allocation2] sm:$0x1]
  %v447 = vld [vmem:[%s5] sm:$0x1]
  %v448 = vmul.f32 %v443, %v447
  %v449 = vadd.f32 %v446, %v448
  %450 = vst [vmem:[#allocation2] sm:$0x1] %v449
  // Predicated region
  $region30: #{cluster_loss_weighted.1} parent=0 // pred_check
    %p451 = pneg %p23
  $region31: #{cluster_loss_weighted.1} parent=0 // pred_check_branch
    %453 = sbr.rel (%p451) target = $region33
  $region32: #{cluster_loss_weighted.1} parent=0 // pred_region
    %v454 = vlaneseq
    %v455 = vshrl.u32 %v454, 7
    %v456 = vld [vmem:[#allocation2] sm:$0x1]
    %v458 = vlaneseq
    %v459 = vshrl.u32 %v458, 7
    %v460 = vsub.s32 0, %v459
    %v461 = vrot.slane %v456, %v460
    %vm463 = vcmp.eq.s32.totalorder %v455, 0
    %v464 = vsel %vm463, %v461, 0.0
    %465 = vst [vmem:[%s6] sm:$0xff] %v464
  $region33: #{cluster_loss_weighted.1} parent=0 // pred_fallthru
    _
  // Predicated region
  $region34: #{cluster_loss_weighted.1} parent=0 // pred_check
    _
  $region35: #{cluster_loss_weighted.1} parent=0 // pred_check_branch
    %467 = sbr.rel (0) target = $region37
  $region36: #{cluster_loss_weighted.1} parent=0 // pred_region
    _
  $region37: #{cluster_loss_weighted.1} parent=0 // pred_fallthru
    _
  // Predicated region
  $region38: #{cluster_loss_weighted.1} parent=0 // pred_check
    _
  $region39: #{cluster_loss_weighted.1} parent=0 // pred_check_branch
    %469 = sbr.rel (0) target = $region41
  $region40: #{cluster_loss_weighted.1} parent=0 // pred_region
    _
  $region41: #{cluster_loss_weighted.1} parent=0 // pred_fallthru
    _

</llo_original>
